<compile_context>
chip_gen: v6e
topology: v6e:2x2x1
jax: 0.10.0
libtpu: 0.0.40
codegen_flags: <defaults>
</compile_context>

<pallas_src>
import jax
import jax.numpy as jnp
from jax.experimental import pallas as pl
from jax.experimental.pallas import tpu as pltpu

EPSILON = 1.0

# Per-input pipeline-buffer budget (f32-equivalent bytes).  Keeps total VMEM
# (2 inputs x 2 buffers + 2 f32 accumulators) around ~6 MiB worst case.
_TILE_BYTES_BUDGET = 1 << 20


def _dice_loss_kernel(p_ref, t_ref, o_ref, acc_inter, acc_sum):
    # p_ref / t_ref: (tile_h, W) tiles of channel 0 in VMEM (native dtype).
    # o_ref:         (1, 1) f32 scalar in SMEM (written once, on last step).
    # acc_inter / acc_sum: (tile_h, W) f32 VMEM accumulators, resident across
    # the whole grid.
    b = pl.program_id(0)
    h = pl.program_id(1)
    is_first = jnp.logical_and(b == 0, h == 0)
    is_last = jnp.logical_and(
        b == pl.num_programs(0) - 1, h == pl.num_programs(1) - 1
    )

    @pl.when(is_first)
    def _init():
        acc_inter[...] = jnp.zeros_like(acc_inter)
        acc_sum[...] = jnp.zeros_like(acc_sum)

    p = p_ref[...].astype(jnp.float32)
    t = t_ref[...].astype(jnp.float32)

    # Pure VPU per-tile accumulation (no cross-lane reduce in the hot loop).
    # sum_p and sum_t are only ever used as (sum_p + sum_t) -> one accumulator.
    acc_inter[...] += p * t
    acc_sum[...] += p + t

    @pl.when(is_last)
    def _finalize():
        intersection = jnp.sum(acc_inter[...])
        denom = jnp.sum(acc_sum[...])
        dice_score = (2.0 * intersection + EPSILON) / (denom + EPSILON)
        o_ref[0, 0] = 1.0 - dice_score


def _pick_tile_h(H, W, itemsize):
    """Pick a tile height that divides H, respects the (8,128) tiling rule
    (or full-extent) and fits the per-buffer VMEM budget."""
    bytes_per_row = W * max(itemsize, 4)  # scratch accumulators are f32
    if H * bytes_per_row <= _TILE_BYTES_BUDGET:
        return H  # whole spatial slab fits -> full-extent dims (always legal)
    best = None
    th = 8
    while th <= H:
        if H % th == 0 and th * bytes_per_row <= _TILE_BYTES_BUDGET:
            best = th
        th += 8
    if best is not None:
        return best
    # No 8-aligned divisor under budget: fall back to the smallest 8-aligned
    # divisor (still correct, just a bigger block), or the full extent.
    th = 8
    while th <= H:
        if H % th == 0:
            return th
        th += 8
    return H


def dice_coefficient_loss(predictions, targets):
    """Matches DiceCoefficientLoss.forward for NCHW inputs."""
    assert predictions.shape == targets.shape
    B, C, H, W = predictions.shape

    itemsize = jnp.dtype(predictions.dtype).itemsize
    tile_h = _pick_tile_h(H, W, itemsize)
    nh = H // tile_h

    # Only channel 0 of each input is actually streamed from HBM.
    n = B * H * W
    cost = pl.CostEstimate(
        flops=3 * n,
        transcendentals=0,
        bytes_accessed=2 * n * itemsize,
    )

    grid_spec = pltpu.PrefetchScalarGridSpec(
        num_scalar_prefetch=0,
        grid=(B, nh),
        in_specs=[
            # Channel 0 is selected directly in the index_map; the B and C
            # block dims are size-1 and squeezed out of the kernel view.
            pl.BlockSpec((None, None, tile_h, W), lambda b, h: (b, 0, h, 0)),
            pl.BlockSpec((None, None, tile_h, W), lambda b, h: (b, 0, h, 0)),
        ],
        out_specs=pl.BlockSpec(memory_space=pltpu.MemorySpace.SMEM),
        scratch_shapes=[
            pltpu.VMEM((tile_h, W), jnp.float32),  # intersection accumulator
            pltpu.VMEM((tile_h, W), jnp.float32),  # fused sum_p + sum_t
        ],
    )

    out = pl.pallas_call(
        _dice_loss_kernel,
        out_shape=jax.ShapeDtypeStruct((1, 1), jnp.float32),
        grid_spec=grid_spec,
        compiler_params=pltpu.CompilerParams(
            # Single-scalar reduction: every grid axis is a reduction axis.
            dimension_semantics=("arbitrary", "arbitrary"),
        ),
        cost_estimate=cost,
    )(predictions, targets)

    return out[0, 0]


if __name__ == "__main__":
    key = jax.random.PRNGKey(0)
    k1, k2 = jax.random.split(key)

    # Small shapes consistent with the module: [B, C, H, W]
    B, C, H, W = 2, 4, 16, 16
    predictions = jax.random.uniform(k1, (B, C, H, W), dtype=jnp.float32)
    targets = (jax.random.uniform(k2, (B, C, H, W)) > 0.5).astype(jnp.float32)

    loss = dice_coefficient_loss(predictions, targets)
    loss = jax.block_until_ready(loss)

    # Pure-JAX reference (same semantics as the PyTorch forward).
    p_flat = predictions[:, 0].reshape(-1)
    t_flat = targets[:, 0].reshape(-1)
    inter = jnp.sum(p_flat * t_flat)
    ref = 1.0 - (2.0 * inter + EPSILON) / (
        jnp.sum(p_flat) + jnp.sum(t_flat) + EPSILON
    )

    assert jnp.allclose(loss, ref, atol=1e-5, rtol=1e-5), (loss, ref)
    print("KERNEL_OK")
</pallas_src>

<mosaic_0001>
module attributes {stable_mosaic.version = 11 : i64} {
  func.func @_dice_loss_kernel(%arg0: i32, %arg1: i32, %arg2: memref<1x1x16x16xf32, #tpu.memory_space<vmem>>, %arg3: memref<1x1x16x16xf32, #tpu.memory_space<vmem>>, %arg4: memref<1x1xf32, #tpu.memory_space<smem>>, %arg5: memref<16x16xf32, #tpu.memory_space<vmem>>, %arg6: memref<16x16xf32, #tpu.memory_space<vmem>>) attributes {dimension_semantics = [#tpu.dimension_semantics<arbitrary>, #tpu.dimension_semantics<arbitrary>], iteration_bounds = array<i64: 2, 1>, scalar_prefetch = 0 : i64, scratch_operands = 2 : i64, tpu.core_type = #tpu.core_type<tc>, window_params = [{transform_indices = @transform_0, window_bounds = array<i64: 1, 1, 16, 16>}, {transform_indices = @transform_1, window_bounds = array<i64: 1, 1, 16, 16>}, {transform_indices = @transform_2, window_bounds = array<i64: 1, 1>}]} {
    %c0_i32 = arith.constant 0 : i32
    %0 = arith.cmpi eq, %arg0, %c0_i32 : i32
    %c0_i32_0 = arith.constant 0 : i32
    %1 = arith.cmpi eq, %arg1, %c0_i32_0 : i32
    %2 = arith.andi %0, %1 : i1
    %c1_i32 = arith.constant 1 : i32
    %3 = arith.cmpi eq, %arg0, %c1_i32 : i32
    %c0_i32_1 = arith.constant 0 : i32
    %4 = arith.cmpi eq, %arg1, %c0_i32_1 : i32
    %5 = arith.andi %3, %4 : i1
    %6 = arith.extui %2 : i1 to i32
    %c0_i32_2 = arith.constant 0 : i32
    %7 = arith.cmpi ne, %6, %c0_i32_2 : i32
    scf.if %7 {
      %cst = arith.constant 0.000000e+00 : f32
      %22 = vector.broadcast %cst : f32 to vector<16x16xf32>
      %c0_19 = arith.constant 0 : index
      %c0_20 = arith.constant 0 : index
      %23 = vector.load %arg5[%c0_19, %c0_20] : memref<16x16xf32, #tpu.memory_space<vmem>>, vector<16x16xf32>
      tpu.vector_store %arg5[%c0_19, %c0_20], %22 {strides = array<i32>} : memref<16x16xf32, #tpu.memory_space<vmem>>, vector<16x16xf32>,
      %cst_21 = arith.constant 0.000000e+00 : f32
      %24 = vector.broadcast %cst_21 : f32 to vector<16x16xf32>
      %c0_22 = arith.constant 0 : index
      %c0_23 = arith.constant 0 : index
      %25 = vector.load %arg6[%c0_22, %c0_23] : memref<16x16xf32, #tpu.memory_space<vmem>>, vector<16x16xf32>
      tpu.vector_store %arg6[%c0_22, %c0_23], %24 {strides = array<i32>} : memref<16x16xf32, #tpu.memory_space<vmem>>, vector<16x16xf32>,
    } else {
    }
    %c0 = arith.constant 0 : index
    %c0_3 = arith.constant 0 : index
    %c0_4 = arith.constant 0 : index
    %c0_5 = arith.constant 0 : index
    %8 = vector.load %arg2[%c0, %c0_3, %c0_4, %c0_5] : memref<1x1x16x16xf32, #tpu.memory_space<vmem>>, vector<1x1x16x16xf32>
    %9 = vector.shape_cast %8 : vector<1x1x16x16xf32> to vector<16x16xf32>
    %c0_6 = arith.constant 0 : index
    %c0_7 = arith.constant 0 : index
    %c0_8 = arith.constant 0 : index
    %c0_9 = arith.constant 0 : index
    %10 = vector.load %arg3[%c0_6, %c0_7, %c0_8, %c0_9] : memref<1x1x16x16xf32, #tpu.memory_space<vmem>>, vector<1x1x16x16xf32>
    %11 = vector.shape_cast %10 : vector<1x1x16x16xf32> to vector<16x16xf32>
    %c0_10 = arith.constant 0 : index
    %c0_11 = arith.constant 0 : index
    %12 = vector.load %arg5[%c0_10, %c0_11] : memref<16x16xf32, #tpu.memory_space<vmem>>, vector<16x16xf32>
    %13 = arith.mulf %9, %11 : vector<16x16xf32>
    %14 = arith.addf %12, %13 : vector<16x16xf32>
    %c0_12 = arith.constant 0 : index
    %c0_13 = arith.constant 0 : index
    %15 = vector.load %arg5[%c0_12, %c0_13] : memref<16x16xf32, #tpu.memory_space<vmem>>, vector<16x16xf32>
    tpu.vector_store %arg5[%c0_12, %c0_13], %14 {strides = array<i32>} : memref<16x16xf32, #tpu.memory_space<vmem>>, vector<16x16xf32>,
    %c0_14 = arith.constant 0 : index
    %c0_15 = arith.constant 0 : index
    %16 = vector.load %arg6[%c0_14, %c0_15] : memref<16x16xf32, #tpu.memory_space<vmem>>, vector<16x16xf32>
    %17 = arith.addf %9, %11 : vector<16x16xf32>
    %18 = arith.addf %16, %17 : vector<16x16xf32>
    %c0_16 = arith.constant 0 : index
    %c0_17 = arith.constant 0 : index
    %19 = vector.load %arg6[%c0_16, %c0_17] : memref<16x16xf32, #tpu.memory_space<vmem>>, vector<16x16xf32>
    tpu.vector_store %arg6[%c0_16, %c0_17], %18 {strides = array<i32>} : memref<16x16xf32, #tpu.memory_space<vmem>>, vector<16x16xf32>,
    %20 = arith.extui %5 : i1 to i32
    %c0_i32_18 = arith.constant 0 : i32
    %21 = arith.cmpi ne, %20, %c0_i32_18 : i32
    scf.if %21 {
      %c0_19 = arith.constant 0 : index
      %c0_20 = arith.constant 0 : index
      %22 = vector.load %arg5[%c0_19, %c0_20] : memref<16x16xf32, #tpu.memory_space<vmem>>, vector<16x16xf32>
      %23 = vector.shape_cast %22 : vector<16x16xf32> to vector<1x16x16xf32>
      %cst = arith.constant dense<0.000000e+00> : vector<1xf32>
      %24 = vector.multi_reduction <add>, %23, %cst [1, 2] : vector<1x16x16xf32> to vector<1xf32>
      %25 = vector.shape_cast %24 : vector<1xf32> to vector<1x1x1xf32>
      %26 = vector.extract %25[0, 0, 0] : f32 from vector<1x1x1xf32>
      %c0_21 = arith.constant 0 : index
      %c0_22 = arith.constant 0 : index
      %27 = vector.load %arg6[%c0_21, %c0_22] : memref<16x16xf32, #tpu.memory_space<vmem>>, vector<16x16xf32>
      %28 = vector.shape_cast %27 : vector<16x16xf32> to vector<1x16x16xf32>
      %cst_23 = arith.constant dense<0.000000e+00> : vector<1xf32>
      %29 = vector.multi_reduction <add>, %28, %cst_23 [1, 2] : vector<1x16x16xf32> to vector<1xf32>
      %30 = vector.shape_cast %29 : vector<1xf32> to vector<1x1x1xf32>
      %31 = vector.extract %30[0, 0, 0] : f32 from vector<1x1x1xf32>
      %cst_24 = arith.constant 2.000000e+00 : f32
      %32 = arith.mulf %cst_24, %26 : f32
      %cst_25 = arith.constant 1.000000e+00 : f32
      %33 = arith.addf %32, %cst_25 : f32
      %cst_26 = arith.constant 1.000000e+00 : f32
      %34 = arith.addf %31, %cst_26 : f32
      %35 = arith.divf %33, %34 : f32
      %cst_27 = arith.constant 1.000000e+00 : f32
      %36 = arith.subf %cst_27, %35 : f32
      %c0_28 = arith.constant 0 : index
      %c0_29 = arith.constant 0 : index
      %37 = memref.load %arg4[%c0_28, %c0_29] : memref<1x1xf32, #tpu.memory_space<smem>>
      memref.store %36, %arg4[%c0_28, %c0_29] : memref<1x1xf32, #tpu.memory_space<smem>>
    } else {
    }
    return
  }
  func.func @transform_0(%arg0: i32, %arg1: i32) -> (i32, i32, i32, i32) {
    %c0_i32 = arith.constant 0 : i32
    %c0_i32_0 = arith.constant 0 : i32
    %c0_i32_1 = arith.constant 0 : i32
    return %arg0, %c0_i32, %arg1, %c0_i32_0 : i32, i32, i32, i32
  }
  func.func @transform_1(%arg0: i32, %arg1: i32) -> (i32, i32, i32, i32) {
    %c0_i32 = arith.constant 0 : i32
    %c0_i32_0 = arith.constant 0 : i32
    %c0_i32_1 = arith.constant 0 : i32
    return %arg0, %c0_i32, %arg1, %c0_i32_0 : i32, i32, i32, i32
  }
  func.func @transform_2(%arg0: i32, %arg1: i32) -> (i32, i32) {
    %c0_i32 = arith.constant 0 : i32
    %c0_i32_0 = arith.constant 0 : i32
    %c0_i32_1 = arith.constant 0 : i32
    return %c0_i32, %c0_i32_0 : i32, i32
  }
}

</mosaic_0001>

<llo_original>
// kernel: tpu_custom_call.1
$region0: #{tpu_custom_call.1}
  #allocation0 [shape = 'u32[]', space=smem, size = 0x4, offset = 0x4, fixed_abs, tag = 'smem constant byte address 0x4 - core index']
  #allocation1 [shape = 'u32[144,128]{1,0:T(1,128)}', space=vmem, size = 0x12000, scoped, tag = 'internal scratch']
  #allocation2 [shape = 'f32[16,16]{1,0:T(8,128)}', space=vmem, size = 0x2000, scoped, tag = 'scratch operand']
  #allocation3 [shape = 'f32[16,16]{1,0:T(8,128)}', space=vmem, size = 0x2000, scoped, tag = 'scratch operand']
  %s0 = inlined_call_operand.hbm [shape: f32[2,4,16,16], index: 0, kind: input, shape index: {}]
  %s1 = inlined_call_operand.hbm [shape: f32[2,4,16,16], index: 1, kind: input, shape index: {}]
  %s2 = inlined_call_operand.hbm [shape: f32[1,1], index: 2, kind: output, shape index: {}]
  %s3 = sld [smem:[#allocation0]]
  $region57: #{tpu_custom_call.1} parent=0
    _
  %s5 = ssub.s32 1, %s3
  %s6 = scalar_select 0, %s5, %s3
  $region1: #{tpu_custom_call.1} parent=0
    #allocation4 [shape = 'u8[16384]{0}', space=vmem, size = 0x4000, scoped, tag = 'input window, operand 0']
    #allocation5 [shape = 's32[2]{0}', space=sflag, size = 0x8, scoped, tag = 'scoped memory for tpu_custom_call.1']
    #allocation6 [shape = 's32[2]{0}', space=sflag, size = 0x8, scoped, tag = 'scoped memory for tpu_custom_call.1']
    #allocation7 [shape = 'u8[16384]{0}', space=vmem, size = 0x4000, scoped, tag = 'input window, operand 1']
    #allocation8 [shape = 's32[2]{0}', space=sflag, size = 0x8, scoped, tag = 'scoped memory for tpu_custom_call.1']
    #allocation9 [shape = 'u8[512]{0}', space=smem, size = 0x200, scoped, tag = 'output window, operand 0, single buffered']
    %7 = vsyncpa [#allocation5], 0
    %s8 = scalar_lea.sflag [#allocation5], 1
    %9 = vsyncpa %s8, 0
    %10 = vsyncpa [#allocation8], 0
    %s11 = scalar_lea.sflag [#allocation8], 1
    %12 = vsyncpa %s11, 0
    %13 = vsyncpa [#allocation6], 0
    loop: start=0, step=1, limit=4
    $region2: #{tpu_custom_call.1} parent=1 // loop_pre_header
      _
    $region3: #{tpu_custom_call.1} parent=1 // loop_header
      %s15 = sphi 0, %s19
      %p16 = scmp.ge.s32.totalorder %s15, 4
      %s22 = sphi 0, %s34
      %s23 = sphi 0, %s30
      %s24 = sphi 0, %s22
      %s25 = sphi 0, %s23
      %s26 = sphi 0, %s24
      %s27 = sphi 0, %s25
      %s39 = sphi 0, %s41
      %s42 = sphi 0, %s39
      %s43 = sphi 0, %s42
      %s59 = sphi 0, %s43
      %s67 = sphi 0, %s69
      %s70 = sphi 0, %s67
      %s71 = sphi 0, %s70
      %s87 = sphi 0, %s71
      %s91 = sphi 0, %s91
      %s93 = sphi 0, %s91
      %s94 = sphi 0, %s93
      %s108 = sphi 0, %s94
    $region4: #{tpu_custom_call.1} parent=1 // loop_header_branch
      %18 = sbr.rel (%p16) target = $region8
    $region5: #{tpu_custom_call.1} parent=1 // loop_body
      %s20 = ssub.s32 %s15, 1
      %s21 = ssub.s32 %s15, 2
      %s28 = sadd.s32 1, %s23
      %p29 = scmp.ge.s32.totalorder %s28, 1
      %s30 = scalar_select %p29, 0, %s28
      %s31 = sadd.s32 1, %s22
      %s32 = scalar_select %p29, %s31, %s22
      %p33 = scmp.ge.s32.totalorder %s32, 2
      %s34 = scalar_select %p33, 0, %s32
      %s35 = ssub.s32 %s22, %s34
      %s36 = ssub.s32 %s23, %s30
      %s37 = sor.u32 %s35, %s36
      %p38 = scmp.eq.s32.totalorder %s37, 0
      %s40 = sadd.s32 %s39, 1
      %s41 = scalar_select %p38, %s39, %s40
      %p44 = pneg %p38
      %p45 = scmp.eq.s32.totalorder %s15, 1
      %p46 = por %p44, %p45
      %p47 = scmp.ne.s32.totalorder %s39, %s42
      %p48 = scmp.eq.s32.totalorder %s15, 0
      %p49 = por %p47, %p48
      %p50 = scmp.ne.s32.totalorder %s39, %s42
      %p51 = scmp.eq.s32.totalorder %s20, 1
      %p52 = por %p50, %p51
      %p53 = scmp.ne.s32.totalorder %s42, %s43
      %p54 = scmp.eq.s32.totalorder %s20, 0
      %p55 = por %p53, %p54
      %p56 = scmp.ne.s32.totalorder %s42, %s43
      %p57 = scmp.eq.s32.totalorder %s21, 1
      %p58 = por %p56, %p57
      %p60 = scmp.ne.s32.totalorder %s43, %s59
      %p61 = scmp.eq.s32.totalorder %s21, 0
      %p62 = por %p60, %p61
      %s63 = ssub.s32 %s22, %s34
      %s64 = ssub.s32 %s23, %s30
      %s65 = sor.u32 %s63, %s64
      %p66 = scmp.eq.s32.totalorder %s65, 0
      %s68 = sadd.s32 %s67, 1
      %s69 = scalar_select %p66, %s67, %s68
      %p72 = pneg %p66
      %p73 = scmp.eq.s32.totalorder %s15, 1
      %p74 = por %p72, %p73
      %p75 = scmp.ne.s32.totalorder %s67, %s70
      %p76 = scmp.eq.s32.totalorder %s15, 0
      %p77 = por %p75, %p76
      %p78 = scmp.ne.s32.totalorder %s67, %s70
      %p79 = scmp.eq.s32.totalorder %s20, 1
      %p80 = por %p78, %p79
      %p81 = scmp.ne.s32.totalorder %s70, %s71
      %p82 = scmp.eq.s32.totalorder %s20, 0
      %p83 = por %p81, %p82
      %p84 = scmp.ne.s32.totalorder %s70, %s71
      %p85 = scmp.eq.s32.totalorder %s21, 1
      %p86 = por %p84, %p85
      %p88 = scmp.ne.s32.totalorder %s71, %s87
      %p89 = scmp.eq.s32.totalorder %s21, 0
      %p90 = por %p88, %p89
      %s92 = sadd.s32 %s91, 1
      %p95 = scmp.eq.s32.totalorder %s15, 1
      %p96 = scmp.ne.s32.totalorder %s91, %s93
      %p97 = scmp.eq.s32.totalorder %s15, 0
      %p98 = por %p96, %p97
      %p99 = scmp.ne.s32.totalorder %s91, %s93
      %p100 = scmp.eq.s32.totalorder %s20, 1
      %p101 = por %p99, %p100
      %p102 = scmp.ne.s32.totalorder %s93, %s94
      %p103 = scmp.eq.s32.totalorder %s20, 0
      %p104 = por %p102, %p103
      %p105 = scmp.ne.s32.totalorder %s93, %s94
      %p106 = scmp.eq.s32.totalorder %s21, 1
      %p107 = por %p105, %p106
      %p109 = scmp.ne.s32.totalorder %s94, %s108
      %p110 = scmp.eq.s32.totalorder %s21, 0
      %p111 = por %p109, %p110
      %p112 = scmp.le.s32.totalorder 1, %s15
      %p113 = scmp.lt.s32.totalorder %s15, 3
      %p114 = pnand %p112, %p113
      %p115 = pneg %p114
      // Predicated region
      $region9: #{tpu_custom_call.1} parent=5 // pred_check
        _
      $region10: #{tpu_custom_call.1} parent=5 // pred_check_branch
        %117 = sbr.rel (%p114) target = $region12
      $region11: #{tpu_custom_call.1} parent=5 // pred_region
        %s118 = ssub.s32 %s15, 1
      $region12: #{tpu_custom_call.1} parent=5 // pred_fallthru
        _
      %p119 = scmp.lt.s32.totalorder %s15, 2
      // Predicated region
      $region13: #{tpu_custom_call.1} parent=5 // pred_check
        %p120 = pneg %p119
      $region14: #{tpu_custom_call.1} parent=5 // pred_check_branch
        %122 = sbr.rel (%p120) target = $region16
      $region15: #{tpu_custom_call.1} parent=5 // pred_region
        // Predicated region
        $region17: #{tpu_custom_call.1} parent=15 // pred_check
          %p123 = pneg %p49
        $region18: #{tpu_custom_call.1} parent=15 // pred_check_branch
          %125 = sbr.rel (%p123) target = $region20
        $region19: #{tpu_custom_call.1} parent=15 // pred_region
          %s126 = sand.u32 %s39, 1
          %s127 = scalar_lea.sflag [#allocation5], %s126
          %s128 = sand.u32 %s39, 1
          %s129 = smul.addr %s128, 16
          %s130 = scalar_lea.vmem [#allocation4], %s129
          %s131 = smul.u32 2, %s23
          %s133 = ssub.s32 256, 256
          %134 = vsyncadd %s127, %s133
          %s135 = smul.addr %s22, 8
          %s136 = sadd.s32 %s131, %s135
          %s137 = smul.addr %s136, 128
          %s138 = scalar_lea.hbm %s0, %s137
          %s139 = sshll.u32 %s130, 4
          %s140 = int_to_ptr.vmem [resolvable:$true] %s139
          %145 = dma.hbm_to_vmem [thread:$0]  %s138, 256, %s140, %s127, 128, 128, 8
        $region20: #{tpu_custom_call.1} parent=15 // pred_fallthru
          _
        // Predicated region
        $region21: #{tpu_custom_call.1} parent=15 // pred_check
          %p146 = pneg %p77
        $region22: #{tpu_custom_call.1} parent=15 // pred_check_branch
          %148 = sbr.rel (%p146) target = $region24
        $region23: #{tpu_custom_call.1} parent=15 // pred_region
          %s149 = sand.u32 %s67, 1
          %s150 = scalar_lea.sflag [#allocation8], %s149
          %s151 = sand.u32 %s67, 1
          %s152 = smul.addr %s151, 16
          %s153 = scalar_lea.vmem [#allocation7], %s152
          %s154 = smul.u32 2, %s23
          %s156 = ssub.s32 256, 256
          %157 = vsyncadd %s150, %s156
          %s158 = smul.addr %s22, 8
          %s159 = sadd.s32 %s154, %s158
          %s160 = smul.addr %s159, 128
          %s161 = scalar_lea.hbm %s1, %s160
          %s162 = sshll.u32 %s153, 4
          %s163 = int_to_ptr.vmem [resolvable:$true] %s162
          %168 = dma.hbm_to_vmem [thread:$0]  %s161, 256, %s163, %s150, 128, 128, 8
        $region24: #{tpu_custom_call.1} parent=15 // pred_fallthru
          _
      $region16: #{tpu_custom_call.1} parent=5 // pred_fallthru
        _
      %p169 = scmp.le.s32.totalorder 1, %s15
      %p170 = scmp.lt.s32.totalorder %s15, 3
      %p171 = pnand %p169, %p170
      %p172 = pneg %p171
      // Predicated region
      $region25: #{tpu_custom_call.1} parent=5 // pred_check
        _
      $region26: #{tpu_custom_call.1} parent=5 // pred_check_branch
        %174 = sbr.rel (%p171) target = $region28
      $region27: #{tpu_custom_call.1} parent=5 // pred_region
        %s175 = ssub.s32 %s15, 1
        %s176 = sand.u32 %s42, 1
        %s177 = scalar_lea.sflag [#allocation5], %s176
        %s178 = sand.u32 %s42, 1
        %s179 = smul.addr %s178, 16
        %s180 = scalar_lea.vmem [#allocation4], %s179
        // Predicated region
        $region29: #{tpu_custom_call.1} parent=27 // pred_check
          %p181 = pneg %p55
        $region30: #{tpu_custom_call.1} parent=27 // pred_check_branch
          %183 = sbr.rel (%p181) target = $region32
        $region31: #{tpu_custom_call.1} parent=27 // pred_region
          %184 = dma.done %s177, 256
        $region32: #{tpu_custom_call.1} parent=27 // pred_fallthru
          _
        %s185 = sand.u32 %s70, 1
        %s186 = scalar_lea.sflag [#allocation8], %s185
        %s187 = sand.u32 %s70, 1
        %s188 = smul.addr %s187, 16
        %s189 = scalar_lea.vmem [#allocation7], %s188
        // Predicated region
        $region33: #{tpu_custom_call.1} parent=27 // pred_check
          %p190 = pneg %p83
        $region34: #{tpu_custom_call.1} parent=27 // pred_check_branch
          %192 = sbr.rel (%p190) target = $region36
        $region35: #{tpu_custom_call.1} parent=27 // pred_region
          %193 = dma.done %s186, 256
        $region36: #{tpu_custom_call.1} parent=27 // pred_fallthru
          _
        %s194 = sand.u32 %s42, 1
        %s195 = scalar_lea.sflag [#allocation5], %s194
        %s196 = sand.u32 %s42, 1
        %s197 = smul.addr %s196, 16
        %s198 = scalar_lea.vmem [#allocation4], %s197
        %p199 = pneg %p55
        %p200 = pneg %p52
        %s201 = sand.u32 %s70, 1
        %s202 = scalar_lea.sflag [#allocation8], %s201
        %s203 = sand.u32 %s70, 1
        %s204 = smul.addr %s203, 16
        %s205 = scalar_lea.vmem [#allocation7], %s204
        %p206 = pneg %p83
        %p207 = pneg %p80
        %p208 = pneg %p104
        %p209 = pneg %p101
        %s210 = smul.u32 2, %s25
        %s211 = smul.u32 2, %s25
        %p212 = scmp.eq.s32.totalorder %s24, 0
        %p213 = scmp.eq.s32.totalorder %s25, 0
        %p214 = pnand %p212, %p213
        %p215 = pneg %p214
        %p216 = scmp.eq.s32.totalorder %s24, 1
        %p217 = pnand %p216, %p213
        %p218 = pneg %p217
        // Predicated region
        $region37: #{tpu_custom_call.1} parent=27 // pred_check
          _
        $region38: #{tpu_custom_call.1} parent=27 // pred_check_branch
          %220 = sbr.rel (%p214) target = $region40
        $region39: #{tpu_custom_call.1} parent=27 // pred_region
          %vm221 = vcmask 130048
          %222 = vst.msk [vmem:[#allocation2] sm:$0xff] %vm221, 0.0
          %223 = vst.msk [vmem:[#allocation2 + $0x8] sm:$0xff] %vm221, 0.0
          %224 = vst.msk [vmem:[#allocation3] sm:$0xff] %vm221, 0.0
          %225 = vst.msk [vmem:[#allocation3 + $0x8] sm:$0xff] %vm221, 0.0
        $region40: #{tpu_custom_call.1} parent=27 // pred_fallthru
          _
        %v226 = vld [vmem:[%s180] sm:$0xff]
        %v227 = vld [vmem:[%s180 + $0x8] sm:$0xff]
        %v228 = vld [vmem:[%s189] sm:$0xff]
        %v229 = vld [vmem:[%s189 + $0x8] sm:$0xff]
        %v230 = vld [vmem:[#allocation2] sm:$0xff]
        %v231 = vld [vmem:[#allocation2 + $0x8] sm:$0xff]
        %v232 = vmul.f32 %v226, %v228
        %v233 = vmul.f32 %v227, %v229
        %v234 = vadd.f32 %v230, %v232
        %v235 = vadd.f32 %v231, %v233
        %vm236 = vcmask 130048
        %237 = vst.msk [vmem:[#allocation2] sm:$0xff] %vm236, %v234
        %238 = vst.msk [vmem:[#allocation2 + $0x8] sm:$0xff] %vm236, %v235
        %v239 = vld [vmem:[#allocation3] sm:$0xff]
        %v240 = vld [vmem:[#allocation3 + $0x8] sm:$0xff]
        %v241 = vadd.f32 %v226, %v228
        %v242 = vadd.f32 %v227, %v229
        %v243 = vadd.f32 %v239, %v241
        %v244 = vadd.f32 %v240, %v242
        %245 = vst.msk [vmem:[#allocation3] sm:$0xff] %vm236, %v243
        %246 = vst.msk [vmem:[#allocation3 + $0x8] sm:$0xff] %vm236, %v244
        // Predicated region
        $region41: #{tpu_custom_call.1} parent=27 // pred_check
          _
        $region42: #{tpu_custom_call.1} parent=27 // pred_check_branch
          %248 = sbr.rel (%p217) target = $region44
        $region43: #{tpu_custom_call.1} parent=27 // pred_region
          %v249 = vld [vmem:[#allocation2] sm:$0xff]
          %v250 = vld [vmem:[#allocation2 + $0x8] sm:$0xff]
          %v251 = vsel %vm236, %v249, 0.0
          %v252 = vsel %vm236, %v250, 0.0
          %v253 = vadd.f32 %v251, %v252
          %254 = vadd.xlane.f32.xlu0 %v253
          %v255 = vpop.xlane.xlu0 %254
          %v256 = vrot.slane %v255, 4
          %v257 = vadd.f32 %v255, %v256
          %v258 = vrot.slane %v257, 2
          %v259 = vadd.f32 %v257, %v258
          %v260 = vrot.slane %v259, 1
          %v261 = vadd.f32 %v259, %v260
          %s262 = vtos %v261
          %v263 = vld [vmem:[#allocation3] sm:$0xff]
          %v264 = vld [vmem:[#allocation3 + $0x8] sm:$0xff]
          %v265 = vsel %vm236, %v263, 0.0
          %v266 = vsel %vm236, %v264, 0.0
          %v267 = vadd.f32 %v265, %v266
          %268 = vadd.xlane.f32.xlu0 %v267
          %v269 = vpop.xlane.xlu0 %268
          %v270 = vrot.slane %v269, 4
          %v271 = vadd.f32 %v269, %v270
          %v272 = vrot.slane %v271, 2
          %v273 = vadd.f32 %v271, %v272
          %v274 = vrot.slane %v273, 1
          %v275 = vadd.f32 %v273, %v274
          %s276 = vtos %v275
          %s277 = smul.f32 %s262, 2.0
          %s278 = sadd.f32 %s277, 1.0
          %s279 = sadd.f32 %s276, 1.0
          %v280 = vstv %s279
          %v281 = vrcp.pop %v280
          %s282 = vtos %v281
          %s283 = smul.f32 %s278, %s282
          %s284 = ssub.f32 1.0, %s283
          %s285 = scalar_lea.smem [#allocation9], 0
          %286 = sst [smem:[%s285]] %s284
        $region44: #{tpu_custom_call.1} parent=27 // pred_fallthru
          _
        // Predicated region
        $region45: #{tpu_custom_call.1} parent=27 // pred_check
          %p287 = pneg %p101
        $region46: #{tpu_custom_call.1} parent=27 // pred_check_branch
          %289 = sbr.rel (%p287) target = $region48
        $region47: #{tpu_custom_call.1} parent=27 // pred_region
          %s291 = ssub.s32 16, 16
          %292 = vsyncadd [#allocation6], %s291
          %295 = dma.smem_to_hbm [#allocation9], 16, %s2, [#allocation6]
        $region48: #{tpu_custom_call.1} parent=27 // pred_fallthru
          _
        // Predicated region
        $region49: #{tpu_custom_call.1} parent=27 // pred_check
          %p296 = pneg %p101
        $region50: #{tpu_custom_call.1} parent=27 // pred_check_branch
          %298 = sbr.rel (%p296) target = $region52
        $region51: #{tpu_custom_call.1} parent=27 // pred_region
          %299 = dma.done [#allocation6], 16
        $region52: #{tpu_custom_call.1} parent=27 // pred_fallthru
          _
        %300 = sfence
      $region28: #{tpu_custom_call.1} parent=5 // pred_fallthru
        _
      %p301 = scmp.le.s32.totalorder 2, %s15
      // Predicated region
      $region53: #{tpu_custom_call.1} parent=5 // pred_check
        %p302 = pneg %p301
      $region54: #{tpu_custom_call.1} parent=5 // pred_check_branch
        %304 = sbr.rel (%p302) target = $region56
      $region55: #{tpu_custom_call.1} parent=5 // pred_region
        %s305 = ssub.s32 %s15, 2
      $region56: #{tpu_custom_call.1} parent=5 // pred_fallthru
        _
    $region6: #{tpu_custom_call.1} parent=1 // loop_footer
      %s19 = sadd.s32 1, %s15
    $region7: #{tpu_custom_call.1} parent=1 // loop_footer_branch
      %14 = sbr.rel target = $region3
    $region8: #{tpu_custom_call.1} parent=1 // loop_exit
      _
    %306 = vsyncpa [#allocation5], 1
    %s307 = scalar_lea.sflag [#allocation5], 1
    %308 = vsyncpa %s307, 1
    %309 = vsyncpa [#allocation8], 1
    %s310 = scalar_lea.sflag [#allocation8], 1
    %311 = vsyncpa %s310, 1
    %312 = vsyncpa [#allocation6], 1
    %s313 = scalar_lea.sflag [#allocation6], 1
    %314 = vsyncpa %s313, 1

</llo_original>
